<compile_context>
chip_gen: v5e
topology: v5e:2x2
jax: 0.10.0
libtpu: 0.0.40
codegen_flags: <defaults>
</compile_context>

<pallas_src>
import functools

import jax
import jax.numpy as jnp
from jax import lax
from jax.experimental import pallas as pl
from jax.experimental.pallas import tpu as pltpu

ACT_DTYPE = jnp.bfloat16      # inter-layer activation / MXU operand dtype
BN_EPS = 1e-5


# ----------------------------------------------------------------------------
# Pallas kernel 1: tiled GEMM with fused BN/bias (+ optional residual, ReLU)
# ----------------------------------------------------------------------------

def _gemm_fused_kernel(*refs, relu, has_res):
    if has_res:
        a_ref, b_ref, s_ref, t_ref, r_ref, o_ref, acc_ref = refs
    else:
        a_ref, b_ref, s_ref, t_ref, o_ref, acc_ref = refs
        r_ref = None

    @pl.when(pl.program_id(2) == 0)
    def _():
        acc_ref[...] = jnp.zeros_like(acc_ref)

    acc_ref[...] += jnp.dot(a_ref[...], b_ref[...],
                            preferred_element_type=jnp.float32)

    @pl.when(pl.program_id(2) == pl.num_programs(2) - 1)
    def _():
        y = acc_ref[...] * s_ref[...] + t_ref[...]          # f32 epilogue
        if has_res:
            y = y + r_ref[...].astype(jnp.float32)
        if relu:
            y = jnp.maximum(y, 0.0)
        o_ref[...] = y.astype(o_ref.dtype)


def _pick_tk(K, cap=1536):
    """K tile that divides K exactly (multiple of 128 when tiled); None => pad."""
    if K <= cap:
        return K
    for tk in range(cap, 0, -128):
        if K % tk == 0:
            return tk
    return None


def gemm_bn_act(a, w, scale, shift, *, residual=None, relu=False,
                out_dtype=ACT_DTYPE, tm=256, tn_max=256):
    """(M,K)@(K,N) with per-output-channel scale/shift (+residual, ReLU) fused."""
    M, K = a.shape
    K2, N = w.shape
    assert K == K2
    tn = N if N <= tn_max else tn_max
    assert N % tn == 0

    tk = _pick_tk(K)
    if tk is None:
        # TODO(synk): K-pad fallback (never hit for this network's shapes).
        Kp = ((K + 127) // 128) * 128
        a = jnp.pad(a, ((0, 0), (0, Kp - K)))
        w = jnp.pad(w, ((0, Kp - K), (0, 0)))
        K, tk = Kp, 128

    grid = (pl.cdiv(M, tm), N // tn, K // tk)
    s2 = scale.reshape(1, N).astype(jnp.float32)
    t2 = shift.reshape(1, N).astype(jnp.float32)

    in_specs = [
        pl.BlockSpec((tm, tk), lambda i, j, k: (i, k)),
        pl.BlockSpec((tk, tn), lambda i, j, k: (k, j)),
        pl.BlockSpec((1, tn), lambda i, j, k: (0, j)),
        pl.BlockSpec((1, tn), lambda i, j, k: (0, j)),
    ]
    args = [a.astype(ACT_DTYPE), w.astype(ACT_DTYPE), s2, t2]
    has_res = residual is not None
    if has_res:
        in_specs.append(pl.BlockSpec((tm, tn), lambda i, j, k: (i, j)))
        args.append(residual.astype(ACT_DTYPE))

    kern = functools.partial(_gemm_fused_kernel, relu=relu, has_res=has_res)
    return pl.pallas_call(
        kern,
        out_shape=jax.ShapeDtypeStruct((M, N), out_dtype),
        grid_spec=pltpu.PrefetchScalarGridSpec(
            num_scalar_prefetch=0,
            grid=grid,
            in_specs=in_specs,
            out_specs=pl.BlockSpec((tm, tn), lambda i, j, k: (i, j)),
            scratch_shapes=[pltpu.VMEM((tm, tn), jnp.float32)]),
        compiler_params=pltpu.CompilerParams(
            dimension_semantics=("parallel", "parallel", "arbitrary")),
    )(*args)


# ----------------------------------------------------------------------------
# Pallas kernel 2: direct 3x3 stride-1 conv (no im2col) with fused BN/bias/ReLU
#   grid = (Cout tiles, B*H output rows, 3 dy taps); dx taps unrolled in-kernel.
#   Weights (3,3,C,tn) stay resident across the whole row/tap sweep for a given j.
# ----------------------------------------------------------------------------

def _conv3x3_fused_kernel(a_ref, w_ref, s_ref, t_ref, o_ref, acc_ref, *, relu, out_w):
    dy = pl.program_id(2)

    @pl.when(dy == 0)
    def _():
        acc_ref[...] = jnp.zeros_like(acc_ref)

    for dx in range(3):                                   # static unroll
        a = a_ref[0, 0, dx:dx + out_w, :]                 # (W, C) bf16 (shifted tap)
        acc_ref[...] += jnp.dot(a, w_ref[dy, dx],
                                preferred_element_type=jnp.float32)

    @pl.when(dy == pl.num_programs(2) - 1)
    def _():
        y = acc_ref[...] * s_ref[...] + t_ref[...]        # f32 epilogue
        if relu:
            y = jnp.maximum(y, 0.0)
        o_ref[0, 0] = y.astype(o_ref.dtype)


def conv3x3_s1_fused(x, w4, scale, shift, *, relu, out_dtype=ACT_DTYPE, tn_max=256):
    """x: (B,H,W,C) NHWC; w4: (3,3,C,N); stride 1, pad 1; BN/bias(+ReLU) fused."""
    B, H, W, C = x.shape
    N = w4.shape[-1]
    tn = N if N <= tn_max else tn_max
    assert N % tn == 0

    xp = jnp.pad(x.astype(ACT_DTYPE), ((0, 0), (1, 1), (1, 1), (0, 0)))
    Wp = W + 2
    s2 = scale.reshape(1, N).astype(jnp.float32)
    t2 = shift.reshape(1, N).astype(jnp.float32)

    kern = functools.partial(_conv3x3_fused_kernel, relu=relu, out_w=W)
    grid = (N // tn, B * H, 3)

    return pl.pallas_call(
        kern,
        out_shape=jax.ShapeDtypeStruct((B, H, W, N), out_dtype),
        grid_spec=pltpu.PrefetchScalarGridSpec(
            num_scalar_prefetch=0,
            grid=grid,
            in_specs=[
                # one padded input row (with dy offset), all channels
                pl.BlockSpec((1, 1, Wp, C),
                             lambda j, m, t: (m // H, (m % H) + t, 0, 0)),
                # full 3x3 weight slab for this Cout tile (resident across m, t)
                pl.BlockSpec((3, 3, C, tn), lambda j, m, t: (0, 0, 0, j)),
                pl.BlockSpec((1, tn), lambda j, m, t: (0, j)),
                pl.BlockSpec((1, tn), lambda j, m, t: (0, j)),
            ],
            out_specs=pl.BlockSpec((1, 1, W, tn),
                                   lambda j, m, t: (m // H, m % H, 0, j)),
            scratch_shapes=[pltpu.VMEM((W, tn), jnp.float32)]),
        compiler_params=pltpu.CompilerParams(
            dimension_semantics=("parallel", "parallel", "arbitrary")),
    )(xp, w4.astype(ACT_DTYPE), s2, t2)


# ----------------------------------------------------------------------------
# Glue: NHWC im2col (only for the 3 stride-2 convs), maxpool, padding helper
# ----------------------------------------------------------------------------

def _im2col_nhwc(x, kh, kw, stride, pad):
    # TODO(synk): only used for stem 7x7/s2 and the two stride-2 3x3 convs;
    # stride-1 3x3 convs use the direct Pallas kernel above (no expansion).
    if pad > 0:
        x = jnp.pad(x, ((0, 0), (pad, pad), (pad, pad), (0, 0)))
    B, H, W, C = x.shape
    Ho = (H - kh) // stride + 1
    Wo = (W - kw) // stride + 1
    cols = []
    for i in range(kh):
        for j in range(kw):
            cols.append(x[:, i:i + stride * Ho:stride, j:j + stride * Wo:stride, :])
    p = jnp.stack(cols, axis=3)                       # (B, Ho, Wo, kh*kw, C)
    return p.reshape(B * Ho * Wo, kh * kw * C), B, Ho, Wo


def max_pool_3x3_s2_p1_nhwc(x):
    # TODO(synk): maxpool kept as lax.reduce_window glue (NHWC) instead of a Pallas stencil.
    return lax.reduce_window(x, jnp.array(-jnp.inf, dtype=x.dtype), lax.max,
                             window_dimensions=(1, 3, 3, 1),
                             window_strides=(1, 2, 2, 1),
                             padding=((0, 0), (1, 1), (1, 1), (0, 0)))


def pad_divide_by(frames, masks, d=16):
    H, W = frames.shape[2], frames.shape[3]
    new_h = H if H % d == 0 else ((H // d) + 1) * d
    new_w = W if W % d == 0 else ((W // d) + 1) * d
    lh, uh = (new_h - H) // 2, (new_h - H) - (new_h - H) // 2
    lw, uw = (new_w - W) // 2, (new_w - W) - (new_w - W) // 2
    pad_array = (int(lw), int(uw), int(lh), int(uh))
    frames = jnp.pad(frames, ((0, 0), (0, 0), (lh, uh), (lw, uw)))
    masks = jnp.pad(masks, ((0, 0), (lh, uh), (lw, uw)))
    return frames, masks, pad_array


# ----------------------------------------------------------------------------
# Parameters (deterministic synthetic init, shapes per Memorize('resnet50'))
# ----------------------------------------------------------------------------

def init_params(seed=0):
    base_key = jax.random.PRNGKey(seed)
    counter = [0]

    def nk():
        counter[0] += 1
        return jax.random.fold_in(base_key, counter[0])

    def conv_w(o, i, kh, kw):
        fan_in = i * kh * kw
        return jax.random.normal(nk(), (o, i, kh, kw), jnp.float32) * (2.0 / fan_in) ** 0.5

    def bn_p(c):
        return {'gamma': 1.0 + 0.1 * jax.random.normal(nk(), (c,), jnp.float32),
                'beta': 0.1 * jax.random.normal(nk(), (c,), jnp.float32),
                'mean': 0.1 * jax.random.normal(nk(), (c,), jnp.float32),
                'var': 1.0 + 0.1 * jnp.abs(jax.random.normal(nk(), (c,), jnp.float32))}

    def bottleneck_p(inplanes, planes, stride, downsample):
        p = {'conv1_w': conv_w(planes, inplanes, 1, 1), 'bn1': bn_p(planes),
             'conv2_w': conv_w(planes, planes, 3, 3), 'bn2': bn_p(planes),
             'conv3_w': conv_w(planes * 4, planes, 1, 1), 'bn3': bn_p(planes * 4),
             'stride': stride}
        if downsample:
            p['ds_conv_w'] = conv_w(planes * 4, inplanes, 1, 1)
            p['ds_bn'] = bn_p(planes * 4)
        return p

    def layer_p(inplanes, planes, blocks, stride):
        ps = [bottleneck_p(inplanes, planes, stride, True)]
        for _ in range(blocks - 1):
            ps.append(bottleneck_p(planes * 4, planes, 1, False))
        return ps

    return {
        'conv1_w': conv_w(64, 3, 7, 7),         # resnet50 stem conv (bias=False)
        'conv1_m_w': conv_w(64, 1, 7, 7),       # Encoder_M.conv1_m (bias=False)
        'bn1': bn_p(64),
        'layer1': layer_p(64, 64, 3, 1),        # res2 -> 256ch
        'layer2': layer_p(256, 128, 4, 2),      # res3 -> 512ch
        'layer3': layer_p(512, 256, 6, 2),      # res4 -> 1024ch
        'kv_key_w': conv_w(128, 1024, 3, 3),    # KeyValue(1024, 128, 512)
        'kv_key_b': 0.1 * jax.random.normal(nk(), (128,), jnp.float32),
        'kv_val_w': conv_w(512, 1024, 3, 3),
        'kv_val_b': 0.1 * jax.random.normal(nk(), (512,), jnp.float32),
        'mean': jnp.array([0.485, 0.456, 0.406], jnp.float32),
        'std': jnp.array([0.229, 0.224, 0.225], jnp.float32),
    }


# ----------------------------------------------------------------------------
# One-time inference plan: fold BN into (scale, shift), reshape weights to GEMM
# layouts, cast to bf16, fold 1/std into the stem conv, merge frame+mask convs.
# ----------------------------------------------------------------------------

def _fold_bn(bn, eps=BN_EPS):
    scale = bn['gamma'] / jnp.sqrt(bn['var'] + eps)
    shift = bn['beta'] - bn['mean'] * scale
    return scale.astype(jnp.float32), shift.astype(jnp.float32)


def _w_1x1(w):          # (O, I, 1, 1) -> (I, O)
    O, I = w.shape[0], w.shape[1]
    return w.reshape(O, I).T.astype(ACT_DTYPE)


def _w_mat(w):          # (O, I, kh, kw) -> (kh*kw*I, O), tap-major / Cin-fast
    O, I, kh, kw = w.shape
    return w.transpose(2, 3, 1, 0).reshape(kh * kw * I, O).astype(ACT_DTYPE)


def _w_3x3(w):          # (O, I, 3, 3) -> (3, 3, I, O)
    return w.transpose(2, 3, 1, 0).astype(ACT_DTYPE)


def prepare_params(params):
    std = params['std']
    # Stem: conv1((f-mean)/std) == conv(w/std) applied to (f-mean) with zero padding,
    # and conv1(f_n) + conv1_m(m) == one conv over channel-concatenated [f-mean, m].
    wf = params['conv1_w'] / std[None, :, None, None]               # (64,3,7,7)
    wcat = jnp.concatenate([wf, params['conv1_m_w']], axis=1)       # (64,4,7,7)
    s1, t1 = _fold_bn(params['bn1'])

    plan = {
        'mean': params['mean'].astype(jnp.float32),
        'stem': {'wmat': _w_mat(wcat), 'scale': s1, 'shift': t1},
        'layers': [],
        'kv_key': {'w4': _w_3x3(params['kv_key_w']),
                   'scale': jnp.ones((params['kv_key_w'].shape[0],), jnp.float32),
                   'shift': params['kv_key_b'].astype(jnp.float32)},
        'kv_val': {'w4': _w_3x3(params['kv_val_w']),
                   'scale': jnp.ones((params['kv_val_w'].shape[0],), jnp.float32),
                   'shift': params['kv_val_b'].astype(jnp.float32)},
    }
    for lname in ('layer1', 'layer2', 'layer3'):
        blocks = []
        for bp in params[lname]:
            sa, ta = _fold_bn(bp['bn1'])
            sb, tb = _fold_bn(bp['bn2'])
            sc, tc = _fold_bn(bp['bn3'])
            blk = {'stride': bp['stride'],
                   'c1': {'w': _w_1x1(bp['conv1_w']), 'scale': sa, 'shift': ta},
                   'c3': {'w': _w_1x1(bp['conv3_w']), 'scale': sc, 'shift': tc}}
            if bp['stride'] == 1:
                blk['c2'] = {'w4': _w_3x3(bp['conv2_w']), 'scale': sb, 'shift': tb}
            else:
                blk['c2'] = {'wmat': _w_mat(bp['conv2_w']), 'scale': sb, 'shift': tb}
            if 'ds_conv_w' in bp:
                sd, td = _fold_bn(bp['ds_bn'])
                blk['ds'] = {'w': _w_1x1(bp['ds_conv_w']), 'scale': sd, 'shift': td}
            blocks.append(blk)
        plan['layers'].append(blocks)
    return plan


# ----------------------------------------------------------------------------
# ResNet bottleneck / forward (all activations NHWC bf16)
# ----------------------------------------------------------------------------

def bottleneck_fused(x, p):
    B, H, W, Cin = x.shape
    stride = p['stride']

    # identity / downsample branch (1x1 stride-s conv == spatial subsample + GEMM)
    if 'ds' in p:
        xi = x if stride == 1 else x[:, ::stride, ::stride, :]
        _, Ho, Wo, _ = xi.shape
        identity = gemm_bn_act(xi.reshape(-1, Cin), p['ds']['w'],
                               p['ds']['scale'], p['ds']['shift'], relu=False)
    else:
        Ho, Wo = H, W
        identity = x.reshape(B * H * W, Cin)

    # conv1 1x1 + bn1 + relu (fused epilogue)
    planes = p['c1']['w'].shape[1]
    out = gemm_bn_act(x.reshape(B * H * W, Cin), p['c1']['w'],
                      p['c1']['scale'], p['c1']['shift'], relu=True)
    out = out.reshape(B, H, W, planes)

    # conv2 3x3 (stride) + bn2 + relu
    if stride == 1:
        out = conv3x3_s1_fused(out, p['c2']['w4'], p['c2']['scale'],
                               p['c2']['shift'], relu=True)
    else:
        rows, _, Ho2, Wo2 = _im2col_nhwc(out, 3, 3, stride, 1)
        out = gemm_bn_act(rows, p['c2']['wmat'], p['c2']['scale'],
                          p['c2']['shift'], relu=True)
        out = out.reshape(B, Ho2, Wo2, planes)

    # conv3 1x1 + bn3 + residual add + relu — all fused in one GEMM epilogue
    Nout = p['c3']['w'].shape[1]
    out = gemm_bn_act(out.reshape(B * Ho * Wo, planes), p['c3']['w'],
                      p['c3']['scale'], p['c3']['shift'],
                      residual=identity, relu=True)
    return out.reshape(B, Ho, Wo, Nout)


def memorize_forward(frames, masks, plan):
    # Public NCHW interface; pad_divide_by([frames, masks], 16).
    frames, masks, _pad = pad_divide_by(frames, masks, 16)

    # NHWC internal layout from here on (single transpose at the boundary).
    f = jnp.transpose(frames, (0, 2, 3, 1)).astype(jnp.float32)          # (B,H,W,3)
    f = f - plan['mean'][None, None, None, :]          # 1/std folded into stem weights
    m = masks[..., None].astype(jnp.float32)                              # (B,H,W,1)
    x_in = jnp.concatenate([f, m], axis=-1).astype(ACT_DTYPE)             # (B,H,W,4)

    # Stem: conv1(f_norm)+conv1_m(m)+BN+ReLU as ONE fused im2col GEMM.
    rows, B, Ho, Wo = _im2col_nhwc(x_in, 7, 7, 2, 3)
    st = plan['stem']
    c1 = gemm_bn_act(rows, st['wmat'], st['scale'], st['shift'], relu=True)
    c1 = c1.reshape(B, Ho, Wo, 64)

    x = max_pool_3x3_s2_p1_nhwc(c1)

    for blocks in plan['layers']:
        for blk in blocks:
            x = bottleneck_fused(x, blk)            # r2 -> r3 -> r4

    # KeyValue head on r4 (1024ch): direct 3x3 kernels, bias fused, f32 outputs.
    k4 = conv3x3_s1_fused(x, plan['kv_key']['w4'], plan['kv_key']['scale'],
                          plan['kv_key']['shift'], relu=False, out_dtype=jnp.float32)
    v4 = conv3x3_s1_fused(x, plan['kv_val']['w4'], plan['kv_val']['scale'],
                          plan['kv_val']['shift'], relu=False, out_dtype=jnp.float32)

    # Back to public NCHW, add the T=1 memory axis (torch.unsqueeze(dim=1)).
    k4e = jnp.transpose(k4, (0, 3, 1, 2))[:, None]      # (B, 1, 128, H/16, W/16)
    v4e = jnp.transpose(v4, (0, 3, 1, 2))[:, None]      # (B, 1, 512, H/16, W/16)
    return k4e, v4e


# ----------------------------------------------------------------------------

if __name__ == "__main__":
    key = jax.random.PRNGKey(0)
    kf, km = jax.random.split(key)
    # Small shapes consistent with the forward: frames NCHW, masks (B, H, W)
    frames = jax.random.uniform(kf, (2, 3, 16, 16), jnp.float32)
    masks = (jax.random.uniform(km, (2, 16, 16)) > 0.5).astype(jnp.float32)

    params = init_params(0)
    plan = prepare_params(params)

    k4e, v4e = memorize_forward(frames, masks, plan)
    jax.block_until_ready((k4e, v4e))

    assert k4e.shape == (2, 1, 128, 1, 1), k4e.shape
    assert v4e.shape == (2, 1, 512, 1, 1), v4e.shape
    assert k4e.dtype == jnp.float32 and v4e.dtype == jnp.float32
    print("KERNEL_OK")
</pallas_src>

<mosaic_0001>
module attributes {stable_mosaic.version = 11 : i64} {
  func.func @_gemm_fused_kernel(%arg0: i32, %arg1: i32, %arg2: i32, %arg3: memref<256x196xbf16, #tpu.memory_space<vmem>>, %arg4: memref<196x64xbf16, #tpu.memory_space<vmem>>, %arg5: memref<1x64xf32, #tpu.memory_space<vmem>>, %arg6: memref<1x64xf32, #tpu.memory_space<vmem>>, %arg7: memref<256x64xbf16, #tpu.memory_space<vmem>>, %arg8: memref<256x64xf32, #tpu.memory_space<vmem>>) attributes {dimension_semantics = [#tpu.dimension_semantics<parallel>, #tpu.dimension_semantics<parallel>, #tpu.dimension_semantics<arbitrary>], iteration_bounds = array<i64: 1, 1, 1>, scalar_prefetch = 0 : i64, scratch_operands = 1 : i64, tpu.core_type = #tpu.core_type<tc>, window_params = [{transform_indices = @transform_0, window_bounds = array<i64: 256, 196>}, {transform_indices = @transform_1, window_bounds = array<i64: 196, 64>}, {transform_indices = @transform_2, window_bounds = array<i64: 1, 64>}, {transform_indices = @transform_3, window_bounds = array<i64: 1, 64>}, {transform_indices = @transform_4, window_bounds = array<i64: 256, 64>}]} {
    %c0_i32 = arith.constant 0 : i32
    %0 = arith.cmpi eq, %arg2, %c0_i32 : i32
    %1 = arith.extui %0 : i1 to i32
    %c0_i32_0 = arith.constant 0 : i32
    %2 = arith.cmpi ne, %1, %c0_i32_0 : i32
    scf.if %2 {
      %cst_10 = arith.constant 0.000000e+00 : f32
      %12 = vector.broadcast %cst_10 : f32 to vector<256x64xf32>
      %c0_11 = arith.constant 0 : index
      %c0_12 = arith.constant 0 : index
      %13 = vector.load %arg8[%c0_11, %c0_12] : memref<256x64xf32, #tpu.memory_space<vmem>>, vector<256x64xf32>
      tpu.vector_store %arg8[%c0_11, %c0_12], %12 {strides = array<i32>} : memref<256x64xf32, #tpu.memory_space<vmem>>, vector<256x64xf32>,
    } else {
    }
    %c0 = arith.constant 0 : index
    %c0_1 = arith.constant 0 : index
    %3 = vector.load %arg8[%c0, %c0_1] : memref<256x64xf32, #tpu.memory_space<vmem>>, vector<256x64xf32>
    %c0_2 = arith.constant 0 : index
    %c0_3 = arith.constant 0 : index
    %4 = vector.load %arg3[%c0_2, %c0_3] : memref<256x196xbf16, #tpu.memory_space<vmem>>, vector<256x196xbf16>
    %c0_4 = arith.constant 0 : index
    %c0_5 = arith.constant 0 : index
    %5 = vector.load %arg4[%c0_4, %c0_5] : memref<196x64xbf16, #tpu.memory_space<vmem>>, vector<196x64xbf16>
    %cst = arith.constant dense<0.000000e+00> : vector<256x64xf32>
    %6 = tpu.matmul %4, %5, %cst {dimension_numbers = #tpu.dot_dimension_numbers<[1], [0], [0], [1], [0, 0, 1, 1], [], []>} : vector<256x196xbf16>, vector<196x64xbf16>, vector<256x64xf32> -> vector<256x64xf32>
    %7 = arith.addf %3, %6 : vector<256x64xf32>
    %c0_6 = arith.constant 0 : index
    %c0_7 = arith.constant 0 : index
    %8 = vector.load %arg8[%c0_6, %c0_7] : memref<256x64xf32, #tpu.memory_space<vmem>>, vector<256x64xf32>
    tpu.vector_store %arg8[%c0_6, %c0_7], %7 {strides = array<i32>} : memref<256x64xf32, #tpu.memory_space<vmem>>, vector<256x64xf32>,
    %c0_i32_8 = arith.constant 0 : i32
    %9 = arith.cmpi eq, %arg2, %c0_i32_8 : i32
    %10 = arith.extui %9 : i1 to i32
    %c0_i32_9 = arith.constant 0 : i32
    %11 = arith.cmpi ne, %10, %c0_i32_9 : i32
    scf.if %11 {
      %c0_10 = arith.constant 0 : index
      %c0_11 = arith.constant 0 : index
      %12 = vector.load %arg8[%c0_10, %c0_11] : memref<256x64xf32, #tpu.memory_space<vmem>>, vector<256x64xf32>
      %c0_12 = arith.constant 0 : index
      %c0_13 = arith.constant 0 : index
      %13 = vector.load %arg5[%c0_12, %c0_13] : memref<1x64xf32, #tpu.memory_space<vmem>>, vector<1x64xf32>
      %14 = vector.broadcast %13 : vector<1x64xf32> to vector<256x64xf32>
      %15 = arith.mulf %12, %14 : vector<256x64xf32>
      %c0_14 = arith.constant 0 : index
      %c0_15 = arith.constant 0 : index
      %16 = vector.load %arg6[%c0_14, %c0_15] : memref<1x64xf32, #tpu.memory_space<vmem>>, vector<1x64xf32>
      %17 = vector.broadcast %16 : vector<1x64xf32> to vector<256x64xf32>
      %18 = arith.addf %15, %17 : vector<256x64xf32>
      %cst_16 = arith.constant 0.000000e+00 : f32
      %19 = vector.broadcast %cst_16 : f32 to vector<256x64xf32>
      %20 = arith.maximumf %18, %19 : vector<256x64xf32>
      %21 = arith.truncf %20 : vector<256x64xf32> to vector<256x64xbf16>
      %c0_17 = arith.constant 0 : index
      %c0_18 = arith.constant 0 : index
      %22 = vector.load %arg7[%c0_17, %c0_18] : memref<256x64xbf16, #tpu.memory_space<vmem>>, vector<256x64xbf16>
      tpu.vector_store %arg7[%c0_17, %c0_18], %21 {strides = array<i32>} : memref<256x64xbf16, #tpu.memory_space<vmem>>, vector<256x64xbf16>,
    } else {
    }
    return
  }
  func.func @transform_0(%arg0: i32, %arg1: i32, %arg2: i32) -> (i32, i32) {
    %c0_i32 = arith.constant 0 : i32
    return %arg0, %arg2 : i32, i32
  }
  func.func @transform_1(%arg0: i32, %arg1: i32, %arg2: i32) -> (i32, i32) {
    %c0_i32 = arith.constant 0 : i32
    return %arg2, %arg1 : i32, i32
  }
  func.func @transform_2(%arg0: i32, %arg1: i32, %arg2: i32) -> (i32, i32) {
    %c0_i32 = arith.constant 0 : i32
    %c0_i32_0 = arith.constant 0 : i32
    return %c0_i32, %arg1 : i32, i32
  }
  func.func @transform_3(%arg0: i32, %arg1: i32, %arg2: i32) -> (i32, i32) {
    %c0_i32 = arith.constant 0 : i32
    %c0_i32_0 = arith.constant 0 : i32
    return %c0_i32, %arg1 : i32, i32
  }
  func.func @transform_4(%arg0: i32, %arg1: i32, %arg2: i32) -> (i32, i32) {
    %c0_i32 = arith.constant 0 : i32
    return %arg0, %arg1 : i32, i32
  }
}

</mosaic_0001>

<llo_original>
// kernel: tpu_custom_call.1
$region0: #{tpu_custom_call.1}
  #allocation0 [shape = 'u32[]', space=smem, size = 0x4, offset = 0x4, fixed_abs, tag = 'smem constant byte address 0x4 - core index']
  #allocation1 [shape = 'u32[72,128]{1,0:T(1,128)}', space=vmem, size = 0x9000, scoped, tag = 'internal scratch']
  #allocation2 [shape = 'f32[256,64]{1,0:T(8,128)}', space=vmem, size = 0x20000, scoped, tag = 'scratch operand']
  %s0 = inlined_call_operand.vmem [shape: bf16[128,196], index: 0, kind: input, shape index: {}]
  %s1 = inlined_call_operand.vmem [shape: bf16[196,64], index: 1, kind: input, shape index: {}]
  %s2 = inlined_call_operand.vmem [shape: f32[1,64], index: 2, kind: input, shape index: {}]
  %s3 = inlined_call_operand.vmem [shape: f32[1,64], index: 3, kind: input, shape index: {}]
  %s4 = inlined_call_operand.vmem [shape: bf16[128,64], index: 4, kind: output, shape index: {}]
  %s5 = sld [smem:[#allocation0]]
  $region71: #{tpu_custom_call.1} parent=0
    _
  %s7 = ssub.s32 1, %s5
  %s8 = scalar_select 0, %s7, %s5
  $region1: #{tpu_custom_call.1} parent=0
    #allocation3 [shape = 'u8[65536]{0}', space=vmem, size = 0x10000, scoped, tag = 'output window, operand 0, single buffered']
    // Predicated region
    $region2: #{tpu_custom_call.1} parent=1 // pred_check
      _
    $region3: #{tpu_custom_call.1} parent=1 // pred_check_branch
      %10 = sbr.rel (0) target = $region5
    $region4: #{tpu_custom_call.1} parent=1 // pred_region
      _
    $region5: #{tpu_custom_call.1} parent=1 // pred_fallthru
      _
    // Predicated region
    $region6: #{tpu_custom_call.1} parent=1 // pred_check
      _
    $region7: #{tpu_custom_call.1} parent=1 // pred_check_branch
      %12 = sbr.rel (0) target = $region9
    $region8: #{tpu_custom_call.1} parent=1 // pred_region
      _
    $region9: #{tpu_custom_call.1} parent=1 // pred_fallthru
      _
    // Predicated region
    $region10: #{tpu_custom_call.1} parent=1 // pred_check
      _
    $region11: #{tpu_custom_call.1} parent=1 // pred_check_branch
      %14 = sbr.rel (0) target = $region13
    $region12: #{tpu_custom_call.1} parent=1 // pred_region
      _
    $region13: #{tpu_custom_call.1} parent=1 // pred_fallthru
      _
    // Predicated region
    $region14: #{tpu_custom_call.1} parent=1 // pred_check
      _
    $region15: #{tpu_custom_call.1} parent=1 // pred_check_branch
      %16 = sbr.rel (0) target = $region17
    $region16: #{tpu_custom_call.1} parent=1 // pred_region
      _
    $region17: #{tpu_custom_call.1} parent=1 // pred_fallthru
      _
    %p18 = scmp.eq.s32.totalorder 0, 0
    // Predicated region
    $region18: #{tpu_custom_call.1} parent=1 // pred_check
      %p19 = pneg %p18
    $region19: #{tpu_custom_call.1} parent=1 // pred_check_branch
      %21 = sbr.rel (%p19) target = $region21
    $region20: #{tpu_custom_call.1} parent=1 // pred_region
      %vm22 = vcmask 523264
      %23 = vst.msk [vmem:[#allocation2] sm:$0xff] %vm22, 0.0
      %24 = vst.msk [vmem:[#allocation2 + $0x8] sm:$0xff] %vm22, 0.0
      %25 = vst.msk [vmem:[#allocation2 + $0x10] sm:$0xff] %vm22, 0.0
      %26 = vst.msk [vmem:[#allocation2 + $0x18] sm:$0xff] %vm22, 0.0
      %27 = vst.msk [vmem:[#allocation2 + $0x20] sm:$0xff] %vm22, 0.0
      %28 = vst.msk [vmem:[#allocation2 + $0x28] sm:$0xff] %vm22, 0.0
      %29 = vst.msk [vmem:[#allocation2 + $0x30] sm:$0xff] %vm22, 0.0
      %30 = vst.msk [vmem:[#allocation2 + $0x38] sm:$0xff] %vm22, 0.0
      %31 = vst.msk [vmem:[#allocation2 + $0x40] sm:$0xff] %vm22, 0.0
      %32 = vst.msk [vmem:[#allocation2 + $0x48] sm:$0xff] %vm22, 0.0
      %33 = vst.msk [vmem:[#allocation2 + $0x50] sm:$0xff] %vm22, 0.0
      %34 = vst.msk [vmem:[#allocation2 + $0x58] sm:$0xff] %vm22, 0.0
      %35 = vst.msk [vmem:[#allocation2 + $0x60] sm:$0xff] %vm22, 0.0
      %36 = vst.msk [vmem:[#allocation2 + $0x68] sm:$0xff] %vm22, 0.0
      %37 = vst.msk [vmem:[#allocation2 + $0x70] sm:$0xff] %vm22, 0.0
      %38 = vst.msk [vmem:[#allocation2 + $0x78] sm:$0xff] %vm22, 0.0
      %39 = vst.msk [vmem:[#allocation2 + $0x80] sm:$0xff] %vm22, 0.0
      %40 = vst.msk [vmem:[#allocation2 + $0x88] sm:$0xff] %vm22, 0.0
      %41 = vst.msk [vmem:[#allocation2 + $0x90] sm:$0xff] %vm22, 0.0
      %42 = vst.msk [vmem:[#allocation2 + $0x98] sm:$0xff] %vm22, 0.0
      %43 = vst.msk [vmem:[#allocation2 + $0xa0] sm:$0xff] %vm22, 0.0
      %44 = vst.msk [vmem:[#allocation2 + $0xa8] sm:$0xff] %vm22, 0.0
      %45 = vst.msk [vmem:[#allocation2 + $0xb0] sm:$0xff] %vm22, 0.0
      %46 = vst.msk [vmem:[#allocation2 + $0xb8] sm:$0xff] %vm22, 0.0
      %47 = vst.msk [vmem:[#allocation2 + $0xc0] sm:$0xff] %vm22, 0.0
      %48 = vst.msk [vmem:[#allocation2 + $0xc8] sm:$0xff] %vm22, 0.0
      %49 = vst.msk [vmem:[#allocation2 + $0xd0] sm:$0xff] %vm22, 0.0
      %50 = vst.msk [vmem:[#allocation2 + $0xd8] sm:$0xff] %vm22, 0.0
      %51 = vst.msk [vmem:[#allocation2 + $0xe0] sm:$0xff] %vm22, 0.0
      %52 = vst.msk [vmem:[#allocation2 + $0xe8] sm:$0xff] %vm22, 0.0
      %53 = vst.msk [vmem:[#allocation2 + $0xf0] sm:$0xff] %vm22, 0.0
      %54 = vst.msk [vmem:[#allocation2 + $0xf8] sm:$0xff] %vm22, 0.0
    $region21: #{tpu_custom_call.1} parent=1 // pred_fallthru
      _
    %v55 = vld [vmem:[#allocation2] sm:$0xff]
    %v56 = vld [vmem:[#allocation2 + $0x8] sm:$0xff]
    %v57 = vld [vmem:[#allocation2 + $0x10] sm:$0xff]
    %v58 = vld [vmem:[#allocation2 + $0x18] sm:$0xff]
    %v59 = vld [vmem:[#allocation2 + $0x20] sm:$0xff]
    %v60 = vld [vmem:[#allocation2 + $0x28] sm:$0xff]
    %v61 = vld [vmem:[#allocation2 + $0x30] sm:$0xff]
    %v62 = vld [vmem:[#allocation2 + $0x38] sm:$0xff]
    %v63 = vld [vmem:[#allocation2 + $0x40] sm:$0xff]
    %v64 = vld [vmem:[#allocation2 + $0x48] sm:$0xff]
    %v65 = vld [vmem:[#allocation2 + $0x50] sm:$0xff]
    %v66 = vld [vmem:[#allocation2 + $0x58] sm:$0xff]
    %v67 = vld [vmem:[#allocation2 + $0x60] sm:$0xff]
    %v68 = vld [vmem:[#allocation2 + $0x68] sm:$0xff]
    %v69 = vld [vmem:[#allocation2 + $0x70] sm:$0xff]
    %v70 = vld [vmem:[#allocation2 + $0x78] sm:$0xff]
    %v71 = vld [vmem:[#allocation2 + $0x80] sm:$0xff]
    %v72 = vld [vmem:[#allocation2 + $0x88] sm:$0xff]
    %v73 = vld [vmem:[#allocation2 + $0x90] sm:$0xff]
    %v74 = vld [vmem:[#allocation2 + $0x98] sm:$0xff]
    %v75 = vld [vmem:[#allocation2 + $0xa0] sm:$0xff]
    %v76 = vld [vmem:[#allocation2 + $0xa8] sm:$0xff]
    %v77 = vld [vmem:[#allocation2 + $0xb0] sm:$0xff]
    %v78 = vld [vmem:[#allocation2 + $0xb8] sm:$0xff]
    %v79 = vld [vmem:[#allocation2 + $0xc0] sm:$0xff]
    %v80 = vld [vmem:[#allocation2 + $0xc8] sm:$0xff]
    %v81 = vld [vmem:[#allocation2 + $0xd0] sm:$0xff]
    %v82 = vld [vmem:[#allocation2 + $0xd8] sm:$0xff]
    %v83 = vld [vmem:[#allocation2 + $0xe0] sm:$0xff]
    %v84 = vld [vmem:[#allocation2 + $0xe8] sm:$0xff]
    %v85 = vld [vmem:[#allocation2 + $0xf0] sm:$0xff]
    %v86 = vld [vmem:[#allocation2 + $0xf8] sm:$0xff]
    %v87 = vld [vmem:[%s0] sm:$0xff]
    %v88 = vld [vmem:[%s0 + $0x8] sm:$0xff]
    %v89 = vld [vmem:[%s0 + $0x10] sm:$0xff]
    %v90 = vld [vmem:[%s0 + $0x18] sm:$0xff]
    %v91 = vld [vmem:[%s0 + $0x20] sm:$0xff]
    %v92 = vld [vmem:[%s0 + $0x28] sm:$0xff]
    %v93 = vld [vmem:[%s0 + $0x30] sm:$0xff]
    %v94 = vld [vmem:[%s0 + $0x38] sm:$0xff]
    %v95 = vld [vmem:[%s0 + $0x40] sm:$0xff]
    %v96 = vld [vmem:[%s0 + $0x48] sm:$0xff]
    %v97 = vld [vmem:[%s0 + $0x50] sm:$0xff]
    %v98 = vld [vmem:[%s0 + $0x58] sm:$0xff]
    %v99 = vld [vmem:[%s0 + $0x60] sm:$0xff]
    %v100 = vld [vmem:[%s0 + $0x68] sm:$0xff]
    %v101 = vld [vmem:[%s0 + $0x70] sm:$0xff]
    %v102 = vld [vmem:[%s0 + $0x78] sm:$0xff]
    %v103 = vld [vmem:[%s0 + $0x80] sm:$0xff]
    %v104 = vld [vmem:[%s0 + $0x88] sm:$0xff]
    %v105 = vld [vmem:[%s0 + $0x90] sm:$0xff]
    %v106 = vld [vmem:[%s0 + $0x98] sm:$0xff]
    %v107 = vld [vmem:[%s0 + $0xa0] sm:$0xff]
    %v108 = vld [vmem:[%s0 + $0xa8] sm:$0xff]
    %v109 = vld [vmem:[%s0 + $0xb0] sm:$0xff]
    %v110 = vld [vmem:[%s0 + $0xb8] sm:$0xff]
    %v111 = vld [vmem:[%s0 + $0xc0] sm:$0xff]
    %v112 = vld [vmem:[%s0 + $0xc8] sm:$0xff]
    %v113 = vld [vmem:[%s0 + $0xd0] sm:$0xff]
    %v114 = vld [vmem:[%s0 + $0xd8] sm:$0xff]
    %v115 = vld [vmem:[%s0 + $0xe0] sm:$0xff]
    %v116 = vld [vmem:[%s0 + $0xe8] sm:$0xff]
    %v117 = vld [vmem:[%s0 + $0xf0] sm:$0xff]
    %v118 = vld [vmem:[%s0 + $0xf8] sm:$0xff]
    %v119 = vld [vmem:[%s1] sm:$0xf]
    %v120 = vld [vmem:[%s1 + $0x4] sm:$0xf]
    %v121 = vld [vmem:[%s1 + $0x8] sm:$0xf]
    %v122 = vld [vmem:[%s1 + $0xc] sm:$0xf]
    %v123 = vld [vmem:[%s1 + $0x10] sm:$0xf]
    %v124 = vld [vmem:[%s1 + $0x14] sm:$0xf]
    %v125 = vld [vmem:[%s1 + $0x18] sm:$0xf]
    %v126 = vld [vmem:[%s1 + $0x1c] sm:$0xf]
    %v127 = vld [vmem:[%s1 + $0x20] sm:$0xf]
    %v128 = vld [vmem:[%s1 + $0x24] sm:$0xf]
    %v129 = vld [vmem:[%s1 + $0x28] sm:$0xf]
    %v130 = vld [vmem:[%s1 + $0x2c] sm:$0xf]
    %v131 = vld [vmem:[%s1 + $0x30] sm:$0xf]
    %v132 = vld [vmem:[%s1 + $0x34] sm:$0xf]
    %v133 = vld [vmem:[%s1 + $0x38] sm:$0xf]
    %v134 = vld [vmem:[%s1 + $0x3c] sm:$0xf]
    %v135 = vld [vmem:[%s1 + $0x40] sm:$0xf]
    %v136 = vld [vmem:[%s1 + $0x44] sm:$0xf]
    %v137 = vld [vmem:[%s1 + $0x48] sm:$0xf]
    %v138 = vld [vmem:[%s1 + $0x4c] sm:$0xf]
    %v139 = vld [vmem:[%s1 + $0x50] sm:$0xf]
    %v140 = vld [vmem:[%s1 + $0x54] sm:$0xf]
    %v141 = vld [vmem:[%s1 + $0x58] sm:$0xf]
    %v142 = vld [vmem:[%s1 + $0x5c] sm:$0xf]
    %v143 = vld [vmem:[%s1 + $0x60] sm:$0x3]
    %v176 = vunpack.c.l.b16 %v87
    %v177 = vunpack.c.h.b16 %v87
    %v178 = vunpack.c.l.b16 %v88
    %v179 = vunpack.c.h.b16 %v88
    %v180 = vunpack.c.l.b16 %v89
    %v181 = vunpack.c.h.b16 %v89
    %v182 = vunpack.c.l.b16 %v90
    %v183 = vunpack.c.h.b16 %v90
    %v184 = vunpack.c.l.b16 %v91
    %v185 = vunpack.c.h.b16 %v91
    %v186 = vunpack.c.l.b16 %v92
    %v187 = vunpack.c.h.b16 %v92
    %v188 = vunpack.c.l.b16 %v93
    %v189 = vunpack.c.h.b16 %v93
    %v190 = vunpack.c.l.b16 %v94
    %v191 = vunpack.c.h.b16 %v94
    %v192 = vunpack.c.l.b16 %v95
    %v193 = vunpack.c.h.b16 %v95
    %v194 = vunpack.c.l.b16 %v96
    %v195 = vunpack.c.h.b16 %v96
    %v196 = vunpack.c.l.b16 %v97
    %v197 = vunpack.c.h.b16 %v97
    %v198 = vunpack.c.l.b16 %v98
    %v199 = vunpack.c.h.b16 %v98
    %v200 = vunpack.c.l.b16 %v99
    %v201 = vunpack.c.h.b16 %v99
    %v202 = vunpack.c.l.b16 %v100
    %v203 = vunpack.c.h.b16 %v100
    %v204 = vunpack.c.l.b16 %v101
    %v205 = vunpack.c.h.b16 %v101
    %v206 = vunpack.c.l.b16 %v102
    %v207 = vunpack.c.h.b16 %v102
    %v208 = vunpack.c.l.b16 %v103
    %v209 = vunpack.c.h.b16 %v103
    %v210 = vunpack.c.l.b16 %v104
    %v211 = vunpack.c.h.b16 %v104
    %v212 = vunpack.c.l.b16 %v105
    %v213 = vunpack.c.h.b16 %v105
    %v214 = vunpack.c.l.b16 %v106
    %v215 = vunpack.c.h.b16 %v106
    %v216 = vunpack.c.l.b16 %v107
    %v217 = vunpack.c.h.b16 %v107
    %v218 = vunpack.c.l.b16 %v108
    %v219 = vunpack.c.h.b16 %v108
    %v220 = vunpack.c.l.b16 %v109
    %v221 = vunpack.c.h.b16 %v109
    %v222 = vunpack.c.l.b16 %v110
    %v223 = vunpack.c.h.b16 %v110
    %v224 = vunpack.c.l.b16 %v111
    %v225 = vunpack.c.h.b16 %v111
    %v226 = vunpack.c.l.b16 %v112
    %v227 = vunpack.c.h.b16 %v112
    %v228 = vunpack.c.l.b16 %v113
    %v229 = vunpack.c.h.b16 %v113
    %v230 = vunpack.c.l.b16 %v114
    %v231 = vunpack.c.h.b16 %v114
    %v232 = vunpack.c.l.b16 %v115
    %v233 = vunpack.c.h.b16 %v115
    %v234 = vunpack.c.l.b16 %v116
    %v235 = vunpack.c.h.b16 %v116
    %v236 = vunpack.c.l.b16 %v117
    %v237 = vunpack.c.h.b16 %v117
    %v238 = vunpack.c.l.b16 %v118
    %v239 = vunpack.c.h.b16 %v118
    %v240 = vpack.c.b16 %v178, %v176
    %v241 = vpack.c.b16 %v179, %v177
    %v242 = vpack.c.b16 %v182, %v180
    %v243 = vpack.c.b16 %v183, %v181
    %v244 = vpack.c.b16 %v186, %v184
    %v245 = vpack.c.b16 %v187, %v185
    %v246 = vpack.c.b16 %v190, %v188
    %v247 = vpack.c.b16 %v191, %v189
    %v248 = vpack.c.b16 %v194, %v192
    %v249 = vpack.c.b16 %v195, %v193
    %v250 = vpack.c.b16 %v198, %v196
    %v251 = vpack.c.b16 %v199, %v197
    %v252 = vpack.c.b16 %v202, %v200
    %v253 = vpack.c.b16 %v203, %v201
    %v254 = vpack.c.b16 %v206, %v204
    %v255 = vpack.c.b16 %v207, %v205
    %v256 = vpack.c.b16 %v210, %v208
    %v257 = vpack.c.b16 %v211, %v209
    %v258 = vpack.c.b16 %v214, %v212
    %v259 = vpack.c.b16 %v215, %v213
    %v260 = vpack.c.b16 %v218, %v216
    %v261 = vpack.c.b16 %v219, %v217
    %v262 = vpack.c.b16 %v222, %v220
    %v263 = vpack.c.b16 %v223, %v221
    %v264 = vpack.c.b16 %v226, %v224
    %v265 = vpack.c.b16 %v227, %v225
    %v266 = vpack.c.b16 %v230, %v228
    %v267 = vpack.c.b16 %v231, %v229
    %v268 = vpack.c.b16 %v234, %v232
    %v269 = vpack.c.b16 %v235, %v233
    %v270 = vpack.c.b16 %v238, %v236
    %v271 = vpack.c.b16 %v239, %v237
    %v313 = vunpack.c.l.b16 %v119
    %v314 = vunpack.c.l.b16 %v120
    %v315 = vunpack.c.l.b16 %v121
    %v316 = vunpack.c.l.b16 %v122
    %v317 = vunpack.c.l.b16 %v123
    %v318 = vunpack.c.l.b16 %v124
    %v319 = vunpack.c.l.b16 %v125
    %v320 = vunpack.c.l.b16 %v126
    %v321 = vunpack.c.l.b16 %v127
    %v322 = vunpack.c.l.b16 %v128
    %v323 = vunpack.c.l.b16 %v129
    %v324 = vunpack.c.l.b16 %v130
    %v325 = vunpack.c.l.b16 %v131
    %v326 = vunpack.c.l.b16 %v132
    %v327 = vunpack.c.l.b16 %v133
    %v328 = vunpack.c.l.b16 %v134
    %v329 = vunpack.c.l.b16 %v135
    %v330 = vunpack.c.l.b16 %v136
    %v331 = vunpack.c.l.b16 %v137
    %v332 = vunpack.c.l.b16 %v138
    %v333 = vunpack.c.l.b16 %v139
    %v334 = vunpack.c.l.b16 %v140
    %v335 = vunpack.c.l.b16 %v141
    %v336 = vunpack.c.l.b16 %v142
    %v337 = vunpack.c.l.b16 %v143
    %v338 = vpack.c.b16 %v314, %v313
    %v339 = vpack.c.b16 %v316, %v315
    %v340 = vpack.c.b16 %v318, %v317
    %v341 = vpack.c.b16 %v320, %v319
    %v342 = vpack.c.b16 %v322, %v321
    %v343 = vpack.c.b16 %v324, %v323
    %v344 = vpack.c.b16 %v326, %v325
    %v345 = vpack.c.b16 %v328, %v327
    %v346 = vpack.c.b16 %v330, %v329
    %v347 = vpack.c.b16 %v332, %v331
    %v348 = vpack.c.b16 %v334, %v333
    %v349 = vpack.c.b16 %v336, %v335
    %v350 = vpack.c.b16 %v337, %v337
    %vm363 = vcmask 556032
    %v365 = vsel %vm363, %v241, 0
    %v368 = vsel %vm363, %v243, 0
    %v371 = vsel %vm363, %v245, 0
    %v374 = vsel %vm363, %v247, 0
    %v377 = vsel %vm363, %v249, 0
    %v380 = vsel %vm363, %v251, 0
    %v383 = vsel %vm363, %v253, 0
    %v386 = vsel %vm363, %v255, 0
    %v389 = vsel %vm363, %v257, 0
    %v392 = vsel %vm363, %v259, 0
    %v395 = vsel %vm363, %v261, 0
    %v398 = vsel %vm363, %v263, 0
    %v401 = vsel %vm363, %v265, 0
    %v404 = vsel %vm363, %v267, 0
    %v407 = vsel %vm363, %v269, 0
    %v410 = vsel %vm363, %v271, 0
    %vm412 = vcmask 1041408
    %v414 = vsel %vm412, %v350, 0
    %416 = vmatpush.bf16.msra.mxu0 %v345
    %417 = vmatpush.bf16.msra.mxu0 %v344
    %418 = vmatpush.bf16.msra.mxu0 %v343
    %419 = vmatpush.bf16.msra.mxu0 %v342
    %420 = vmatpush.bf16.msra.mxu0 %v341
    %421 = vmatpush.bf16.msra.mxu0 %v340
    %422 = vmatpush.bf16.msra.mxu0 %v339
    %423 = vmatpush.bf16.msra.mxu0 %v338
    %424 = vmatmul.bf16.gmra.mxu0 %v240
    %v425 = vpop.f32.mrf.mxu0
    %v426 = vadd.f32 0.0, %v425
    %v427 = vpop.f32.mrf.mxu0
    %v428 = vadd.f32 0.0, %v427
    %429 = vmatmul.bf16.gmra.mxu0 %v242
    %v430 = vpop.f32.mrf.mxu0
    %v431 = vadd.f32 0.0, %v430
    %v432 = vpop.f32.mrf.mxu0
    %v433 = vadd.f32 0.0, %v432
    %434 = vmatmul.bf16.gmra.mxu0 %v244
    %v435 = vpop.f32.mrf.mxu0
    %v436 = vadd.f32 0.0, %v435
    %v437 = vpop.f32.mrf.mxu0
    %v438 = vadd.f32 0.0, %v437
    %439 = vmatmul.bf16.gmra.mxu0 %v246
    %v440 = vpop.f32.mrf.mxu0
    %v441 = vadd.f32 0.0, %v440
    %v442 = vpop.f32.mrf.mxu0
    %v443 = vadd.f32 0.0, %v442
    %444 = vmatmul.bf16.gmra.mxu0 %v248
    %v445 = vpop.f32.mrf.mxu0
    %v446 = vadd.f32 0.0, %v445
    %v447 = vpop.f32.mrf.mxu0
    %v448 = vadd.f32 0.0, %v447
    %449 = vmatmul.bf16.gmra.mxu0 %v250
    %v450 = vpop.f32.mrf.mxu0
    %v451 = vadd.f32 0.0, %v450
    %v452 = vpop.f32.mrf.mxu0
    %v453 = vadd.f32 0.0, %v452
    %454 = vmatmul.bf16.gmra.mxu0 %v252
    %v455 = vpop.f32.mrf.mxu0
    %v456 = vadd.f32 0.0, %v455
    %v457 = vpop.f32.mrf.mxu0
    %v458 = vadd.f32 0.0, %v457
    %459 = vmatmul.bf16.gmra.mxu0 %v254
    %v460 = vpop.f32.mrf.mxu0
    %v461 = vadd.f32 0.0, %v460
    %v462 = vpop.f32.mrf.mxu0
    %v463 = vadd.f32 0.0, %v462
    %464 = vmatmul.bf16.gmra.mxu0 %v256
    %v465 = vpop.f32.mrf.mxu0
    %v466 = vadd.f32 0.0, %v465
    %v467 = vpop.f32.mrf.mxu0
    %v468 = vadd.f32 0.0, %v467
    %469 = vmatmul.bf16.gmra.mxu0 %v258
    %v470 = vpop.f32.mrf.mxu0
    %v471 = vadd.f32 0.0, %v470
    %v472 = vpop.f32.mrf.mxu0
    %v473 = vadd.f32 0.0, %v472
    %474 = vmatmul.bf16.gmra.mxu0 %v260
    %v475 = vpop.f32.mrf.mxu0
    %v476 = vadd.f32 0.0, %v475
    %v477 = vpop.f32.mrf.mxu0
    %v478 = vadd.f32 0.0, %v477
    %479 = vmatmul.bf16.gmra.mxu0 %v262
    %v480 = vpop.f32.mrf.mxu0
    %v481 = vadd.f32 0.0, %v480
    %v482 = vpop.f32.mrf.mxu0
    %v483 = vadd.f32 0.0, %v482
    %484 = vmatmul.bf16.gmra.mxu0 %v264
    %v485 = vpop.f32.mrf.mxu0
    %v486 = vadd.f32 0.0, %v485
    %v487 = vpop.f32.mrf.mxu0
    %v488 = vadd.f32 0.0, %v487
    %489 = vmatmul.bf16.gmra.mxu0 %v266
    %v490 = vpop.f32.mrf.mxu0
    %v491 = vadd.f32 0.0, %v490
    %v492 = vpop.f32.mrf.mxu0
    %v493 = vadd.f32 0.0, %v492
    %494 = vmatmul.bf16.gmra.mxu0 %v268
    %v495 = vpop.f32.mrf.mxu0
    %v496 = vadd.f32 0.0, %v495
    %v497 = vpop.f32.mrf.mxu0
    %v498 = vadd.f32 0.0, %v497
    %499 = vmatmul.bf16.gmra.mxu0 %v270
    %v500 = vpop.f32.mrf.mxu0
    %v501 = vadd.f32 0.0, %v500
    %v502 = vpop.f32.mrf.mxu0
    %v503 = vadd.f32 0.0, %v502
    %504 = vdwg.mxu0
    %505 = vmatpush.bf16.msra.mxu0 0
    %506 = vmatpush.bf16.msra.mxu0 0
    %507 = vmatpush.bf16.msra.mxu0 0
    %508 = vmatpush.bf16.msra.mxu0 %v414
    %509 = vmatpush.bf16.msra.mxu0 %v349
    %510 = vmatpush.bf16.msra.mxu0 %v348
    %511 = vmatpush.bf16.msra.mxu0 %v347
    %512 = vmatpush.bf16.msra.mxu0 %v346
    %513 = vmatmul.bf16.gmra.mxu0 %v365
    %v514 = vpop.f32.mrf.mxu0
    %v515 = vadd.f32 %v426, %v514
    %v516 = vpop.f32.mrf.mxu0
    %v517 = vadd.f32 %v428, %v516
    %518 = vmatmul.bf16.gmra.mxu0 %v368
    %v519 = vpop.f32.mrf.mxu0
    %v520 = vadd.f32 %v431, %v519
    %v521 = vpop.f32.mrf.mxu0
    %v522 = vadd.f32 %v433, %v521
    %523 = vmatmul.bf16.gmra.mxu0 %v371
    %v524 = vpop.f32.mrf.mxu0
    %v525 = vadd.f32 %v436, %v524
    %v526 = vpop.f32.mrf.mxu0
    %v527 = vadd.f32 %v438, %v526
    %528 = vmatmul.bf16.gmra.mxu0 %v374
    %v529 = vpop.f32.mrf.mxu0
    %v530 = vadd.f32 %v441, %v529
    %v531 = vpop.f32.mrf.mxu0
    %v532 = vadd.f32 %v443, %v531
    %533 = vmatmul.bf16.gmra.mxu0 %v377
    %v534 = vpop.f32.mrf.mxu0
    %v535 = vadd.f32 %v446, %v534
    %v536 = vpop.f32.mrf.mxu0
    %v537 = vadd.f32 %v448, %v536
    %538 = vmatmul.bf16.gmra.mxu0 %v380
    %v539 = vpop.f32.mrf.mxu0
    %v540 = vadd.f32 %v451, %v539
    %v541 = vpop.f32.mrf.mxu0
    %v542 = vadd.f32 %v453, %v541
    %543 = vmatmul.bf16.gmra.mxu0 %v383
    %v544 = vpop.f32.mrf.mxu0
    %v545 = vadd.f32 %v456, %v544
    %v546 = vpop.f32.mrf.mxu0
    %v547 = vadd.f32 %v458, %v546
    %548 = vmatmul.bf16.gmra.mxu0 %v386
    %v549 = vpop.f32.mrf.mxu0
    %v550 = vadd.f32 %v461, %v549
    %v551 = vpop.f32.mrf.mxu0
    %v552 = vadd.f32 %v463, %v551
    %553 = vmatmul.bf16.gmra.mxu0 %v389
    %v554 = vpop.f32.mrf.mxu0
    %v555 = vadd.f32 %v466, %v554
    %v556 = vpop.f32.mrf.mxu0
    %v557 = vadd.f32 %v468, %v556
    %558 = vmatmul.bf16.gmra.mxu0 %v392
    %v559 = vpop.f32.mrf.mxu0
    %v560 = vadd.f32 %v471, %v559
    %v561 = vpop.f32.mrf.mxu0
    %v562 = vadd.f32 %v473, %v561
    %563 = vmatmul.bf16.gmra.mxu0 %v395
    %v564 = vpop.f32.mrf.mxu0
    %v565 = vadd.f32 %v476, %v564
    %v566 = vpop.f32.mrf.mxu0
    %v567 = vadd.f32 %v478, %v566
    %568 = vmatmul.bf16.gmra.mxu0 %v398
    %v569 = vpop.f32.mrf.mxu0
    %v570 = vadd.f32 %v481, %v569
    %v571 = vpop.f32.mrf.mxu0
    %v572 = vadd.f32 %v483, %v571
    %573 = vmatmul.bf16.gmra.mxu0 %v401
    %v574 = vpop.f32.mrf.mxu0
    %v575 = vadd.f32 %v486, %v574
    %v576 = vpop.f32.mrf.mxu0
    %v577 = vadd.f32 %v488, %v576
    %578 = vmatmul.bf16.gmra.mxu0 %v404
    %v579 = vpop.f32.mrf.mxu0
    %v580 = vadd.f32 %v491, %v579
    %v581 = vpop.f32.mrf.mxu0
    %v582 = vadd.f32 %v493, %v581
    %583 = vmatmul.bf16.gmra.mxu0 %v407
    %v584 = vpop.f32.mrf.mxu0
    %v585 = vadd.f32 %v496, %v584
    %v586 = vpop.f32.mrf.mxu0
    %v587 = vadd.f32 %v498, %v586
    %588 = vmatmul.bf16.gmra.mxu0 %v410
    %v589 = vpop.f32.mrf.mxu0
    %v590 = vadd.f32 %v501, %v589
    %v591 = vpop.f32.mrf.mxu0
    %v592 = vadd.f32 %v503, %v591
    %593 = vdwg.mxu0
    %v594 = vadd.f32 %v55, %v515
    %v595 = vadd.f32 %v56, %v517
    %v596 = vadd.f32 %v57, %v520
    %v597 = vadd.f32 %v58, %v522
    %v598 = vadd.f32 %v59, %v525
    %v599 = vadd.f32 %v60, %v527
    %v600 = vadd.f32 %v61, %v530
    %v601 = vadd.f32 %v62, %v532
    %v602 = vadd.f32 %v63, %v535
    %v603 = vadd.f32 %v64, %v537
    %v604 = vadd.f32 %v65, %v540
    %v605 = vadd.f32 %v66, %v542
    %v606 = vadd.f32 %v67, %v545
    %v607 = vadd.f32 %v68, %v547
    %v608 = vadd.f32 %v69, %v550
    %v609 = vadd.f32 %v70, %v552
    %v610 = vadd.f32 %v71, %v555
    %v611 = vadd.f32 %v72, %v557
    %v612 = vadd.f32 %v73, %v560
    %v613 = vadd.f32 %v74, %v562
    %v614 = vadd.f32 %v75, %v565
    %v615 = vadd.f32 %v76, %v567
    %v616 = vadd.f32 %v77, %v570
    %v617 = vadd.f32 %v78, %v572
    %v618 = vadd.f32 %v79, %v575
    %v619 = vadd.f32 %v80, %v577
    %v620 = vadd.f32 %v81, %v580
    %v621 = vadd.f32 %v82, %v582
    %v622 = vadd.f32 %v83, %v585
    %v623 = vadd.f32 %v84, %v587
    %v624 = vadd.f32 %v85, %v590
    %v625 = vadd.f32 %v86, %v592
    %vm626 = vcmask 523264
    %627 = vst.msk [vmem:[#allocation2] sm:$0xff] %vm626, %v594
    %628 = vst.msk [vmem:[#allocation2 + $0x8] sm:$0xff] %vm626, %v595
    %629 = vst.msk [vmem:[#allocation2 + $0x10] sm:$0xff] %vm626, %v596
    %630 = vst.msk [vmem:[#allocation2 + $0x18] sm:$0xff] %vm626, %v597
    %631 = vst.msk [vmem:[#allocation2 + $0x20] sm:$0xff] %vm626, %v598
    %632 = vst.msk [vmem:[#allocation2 + $0x28] sm:$0xff] %vm626, %v599
    %633 = vst.msk [vmem:[#allocation2 + $0x30] sm:$0xff] %vm626, %v600
    %634 = vst.msk [vmem:[#allocation2 + $0x38] sm:$0xff] %vm626, %v601
    %635 = vst.msk [vmem:[#allocation2 + $0x40] sm:$0xff] %vm626, %v602
    %636 = vst.msk [vmem:[#allocation2 + $0x48] sm:$0xff] %vm626, %v603
    %637 = vst.msk [vmem:[#allocation2 + $0x50] sm:$0xff] %vm626, %v604
    %638 = vst.msk [vmem:[#allocation2 + $0x58] sm:$0xff] %vm626, %v605
    %639 = vst.msk [vmem:[#allocation2 + $0x60] sm:$0xff] %vm626, %v606
    %640 = vst.msk [vmem:[#allocation2 + $0x68] sm:$0xff] %vm626, %v607
    %641 = vst.msk [vmem:[#allocation2 + $0x70] sm:$0xff] %vm626, %v608
    %642 = vst.msk [vmem:[#allocation2 + $0x78] sm:$0xff] %vm626, %v609
    %643 = vst.msk [vmem:[#allocation2 + $0x80] sm:$0xff] %vm626, %v610
    %644 = vst.msk [vmem:[#allocation2 + $0x88] sm:$0xff] %vm626, %v611
    %645 = vst.msk [vmem:[#allocation2 + $0x90] sm:$0xff] %vm626, %v612
    %646 = vst.msk [vmem:[#allocation2 + $0x98] sm:$0xff] %vm626, %v613
    %647 = vst.msk [vmem:[#allocation2 + $0xa0] sm:$0xff] %vm626, %v614
    %648 = vst.msk [vmem:[#allocation2 + $0xa8] sm:$0xff] %vm626, %v615
    %649 = vst.msk [vmem:[#allocation2 + $0xb0] sm:$0xff] %vm626, %v616
    %650 = vst.msk [vmem:[#allocation2 + $0xb8] sm:$0xff] %vm626, %v617
    %651 = vst.msk [vmem:[#allocation2 + $0xc0] sm:$0xff] %vm626, %v618
    %652 = vst.msk [vmem:[#allocation2 + $0xc8] sm:$0xff] %vm626, %v619
    %653 = vst.msk [vmem:[#allocation2 + $0xd0] sm:$0xff] %vm626, %v620
    %654 = vst.msk [vmem:[#allocation2 + $0xd8] sm:$0xff] %vm626, %v621
    %655 = vst.msk [vmem:[#allocation2 + $0xe0] sm:$0xff] %vm626, %v622
    %656 = vst.msk [vmem:[#allocation2 + $0xe8] sm:$0xff] %vm626, %v623
    %657 = vst.msk [vmem:[#allocation2 + $0xf0] sm:$0xff] %vm626, %v624
    %658 = vst.msk [vmem:[#allocation2 + $0xf8] sm:$0xff] %vm626, %v625
    // Predicated region
    $region22: #{tpu_custom_call.1} parent=1 // pred_check
      %p659 = pneg %p18
    $region23: #{tpu_custom_call.1} parent=1 // pred_check_branch
      %661 = sbr.rel (%p659) target = $region25
    $region24: #{tpu_custom_call.1} parent=1 // pred_region
      %v662 = vld [vmem:[#allocation2] sm:$0xff]
      %v663 = vld [vmem:[#allocation2 + $0x8] sm:$0xff]
      %v664 = vld [vmem:[#allocation2 + $0x10] sm:$0xff]
      %v665 = vld [vmem:[#allocation2 + $0x18] sm:$0xff]
      %v666 = vld [vmem:[#allocation2 + $0x20] sm:$0xff]
      %v667 = vld [vmem:[#allocation2 + $0x28] sm:$0xff]
      %v668 = vld [vmem:[#allocation2 + $0x30] sm:$0xff]
      %v669 = vld [vmem:[#allocation2 + $0x38] sm:$0xff]
      %v670 = vld [vmem:[#allocation2 + $0x40] sm:$0xff]
      %v671 = vld [vmem:[#allocation2 + $0x48] sm:$0xff]
      %v672 = vld [vmem:[#allocation2 + $0x50] sm:$0xff]
      %v673 = vld [vmem:[#allocation2 + $0x58] sm:$0xff]
      %v674 = vld [vmem:[#allocation2 + $0x60] sm:$0xff]
      %v675 = vld [vmem:[#allocation2 + $0x68] sm:$0xff]
      %v676 = vld [vmem:[#allocation2 + $0x70] sm:$0xff]
      %v677 = vld [vmem:[#allocation2 + $0x78] sm:$0xff]
      %v678 = vld [vmem:[#allocation2 + $0x80] sm:$0xff]
      %v679 = vld [vmem:[#allocation2 + $0x88] sm:$0xff]
      %v680 = vld [vmem:[#allocation2 + $0x90] sm:$0xff]
      %v681 = vld [vmem:[#allocation2 + $0x98] sm:$0xff]
      %v682 = vld [vmem:[#allocation2 + $0xa0] sm:$0xff]
      %v683 = vld [vmem:[#allocation2 + $0xa8] sm:$0xff]
      %v684 = vld [vmem:[#allocation2 + $0xb0] sm:$0xff]
      %v685 = vld [vmem:[#allocation2 + $0xb8] sm:$0xff]
      %v686 = vld [vmem:[#allocation2 + $0xc0] sm:$0xff]
      %v687 = vld [vmem:[#allocation2 + $0xc8] sm:$0xff]
      %v688 = vld [vmem:[#allocation2 + $0xd0] sm:$0xff]
      %v689 = vld [vmem:[#allocation2 + $0xd8] sm:$0xff]
      %v690 = vld [vmem:[#allocation2 + $0xe0] sm:$0xff]
      %v691 = vld [vmem:[#allocation2 + $0xe8] sm:$0xff]
      %v692 = vld [vmem:[#allocation2 + $0xf0] sm:$0xff]
      %v693 = vld [vmem:[#allocation2 + $0xf8] sm:$0xff]
      %v694 = vld [vmem:[%s2] sm:$0x1]
      %v696 = vperm.slane %v694, 0
      %v698 = vmul.f32 %v662, %v696
      %v699 = vmul.f32 %v663, %v696
      %v700 = vmul.f32 %v664, %v696
      %v701 = vmul.f32 %v665, %v696
      %v702 = vmul.f32 %v666, %v696
      %v703 = vmul.f32 %v667, %v696
      %v704 = vmul.f32 %v668, %v696
      %v705 = vmul.f32 %v669, %v696
      %v706 = vmul.f32 %v670, %v696
      %v707 = vmul.f32 %v671, %v696
      %v708 = vmul.f32 %v672, %v696
      %v709 = vmul.f32 %v673, %v696
      %v710 = vmul.f32 %v674, %v696
      %v711 = vmul.f32 %v675, %v696
      %v712 = vmul.f32 %v676, %v696
      %v713 = vmul.f32 %v677, %v696
      %v714 = vmul.f32 %v678, %v696
      %v715 = vmul.f32 %v679, %v696
      %v716 = vmul.f32 %v680, %v696
      %v717 = vmul.f32 %v681, %v696
      %v718 = vmul.f32 %v682, %v696
      %v719 = vmul.f32 %v683, %v696
      %v720 = vmul.f32 %v684, %v696
      %v721 = vmul.f32 %v685, %v696
      %v722 = vmul.f32 %v686, %v696
      %v723 = vmul.f32 %v687, %v696
      %v724 = vmul.f32 %v688, %v696
      %v725 = vmul.f32 %v689, %v696
      %v726 = vmul.f32 %v690, %v696
      %v727 = vmul.f32 %v691, %v696
      %v728 = vmul.f32 %v692, %v696
      %v729 = vmul.f32 %v693, %v696
      %v730 = vld [vmem:[%s3] sm:$0x1]
      %v732 = vperm.slane %v730, 0
      %v734 = vadd.f32 %v698, %v732
      %v735 = vadd.f32 %v699, %v732
      %v736 = vadd.f32 %v700, %v732
      %v737 = vadd.f32 %v701, %v732
      %v738 = vadd.f32 %v702, %v732
      %v739 = vadd.f32 %v703, %v732
      %v740 = vadd.f32 %v704, %v732
      %v741 = vadd.f32 %v705, %v732
      %v742 = vadd.f32 %v706, %v732
      %v743 = vadd.f32 %v707, %v732
      %v744 = vadd.f32 %v708, %v732
      %v745 = vadd.f32 %v709, %v732
      %v746 = vadd.f32 %v710, %v732
      %v747 = vadd.f32 %v711, %v732
      %v748 = vadd.f32 %v712, %v732
      %v749 = vadd.f32 %v713, %v732
      %v750 = vadd.f32 %v714, %v732
      %v751 = vadd.f32 %v715, %v732
      %v752 = vadd.f32 %v716, %v732
      %v753 = vadd.f32 %v717, %v732
      %v754 = vadd.f32 %v718, %v732
      %v755 = vadd.f32 %v719, %v732
      %v756 = vadd.f32 %v720, %v732
      %v757 = vadd.f32 %v721, %v732
      %v758 = vadd.f32 %v722, %v732
      %v759 = vadd.f32 %v723, %v732
      %v760 = vadd.f32 %v724, %v732
      %v761 = vadd.f32 %v725, %v732
      %v762 = vadd.f32 %v726, %v732
      %v763 = vadd.f32 %v727, %v732
      %v764 = vadd.f32 %v728, %v732
      %v765 = vadd.f32 %v729, %v732
      %v766 = vmax.f32 %v734, 0.0
      %v767 = vmax.f32 %v735, 0.0
      %v768 = vmax.f32 %v736, 0.0
      %v769 = vmax.f32 %v737, 0.0
      %v770 = vmax.f32 %v738, 0.0
      %v771 = vmax.f32 %v739, 0.0
      %v772 = vmax.f32 %v740, 0.0
      %v773 = vmax.f32 %v741, 0.0
      %v774 = vmax.f32 %v742, 0.0
      %v775 = vmax.f32 %v743, 0.0
      %v776 = vmax.f32 %v744, 0.0
      %v777 = vmax.f32 %v745, 0.0
      %v778 = vmax.f32 %v746, 0.0
      %v779 = vmax.f32 %v747, 0.0
      %v780 = vmax.f32 %v748, 0.0
      %v781 = vmax.f32 %v749, 0.0
      %v782 = vmax.f32 %v750, 0.0
      %v783 = vmax.f32 %v751, 0.0
      %v784 = vmax.f32 %v752, 0.0
      %v785 = vmax.f32 %v753, 0.0
      %v786 = vmax.f32 %v754, 0.0
      %v787 = vmax.f32 %v755, 0.0
      %v788 = vmax.f32 %v756, 0.0
      %v789 = vmax.f32 %v757, 0.0
      %v790 = vmax.f32 %v758, 0.0
      %v791 = vmax.f32 %v759, 0.0
      %v792 = vmax.f32 %v760, 0.0
      %v793 = vmax.f32 %v761, 0.0
      %v794 = vmax.f32 %v762, 0.0
      %v795 = vmax.f32 %v763, 0.0
      %v796 = vmax.f32 %v764, 0.0
      %v797 = vmax.f32 %v765, 0.0
      %v798 = vpack.c.bf16 %v766, %v766
      %v799 = vpack.c.bf16 %v767, %v767
      %v800 = vpack.c.bf16 %v768, %v768
      %v801 = vpack.c.bf16 %v769, %v769
      %v802 = vpack.c.bf16 %v770, %v770
      %v803 = vpack.c.bf16 %v771, %v771
      %v804 = vpack.c.bf16 %v772, %v772
      %v805 = vpack.c.bf16 %v773, %v773
      %v806 = vpack.c.bf16 %v774, %v774
      %v807 = vpack.c.bf16 %v775, %v775
      %v808 = vpack.c.bf16 %v776, %v776
      %v809 = vpack.c.bf16 %v777, %v777
      %v810 = vpack.c.bf16 %v778, %v778
      %v811 = vpack.c.bf16 %v779, %v779
      %v812 = vpack.c.bf16 %v780, %v780
      %v813 = vpack.c.bf16 %v781, %v781
      %v814 = vpack.c.bf16 %v782, %v782
      %v815 = vpack.c.bf16 %v783, %v783
      %v816 = vpack.c.bf16 %v784, %v784
      %v817 = vpack.c.bf16 %v785, %v785
      %v818 = vpack.c.bf16 %v786, %v786
      %v819 = vpack.c.bf16 %v787, %v787
      %v820 = vpack.c.bf16 %v788, %v788
      %v821 = vpack.c.bf16 %v789, %v789
      %v822 = vpack.c.bf16 %v790, %v790
      %v823 = vpack.c.bf16 %v791, %v791
      %v824 = vpack.c.bf16 %v792, %v792
      %v825 = vpack.c.bf16 %v793, %v793
      %v826 = vpack.c.bf16 %v794, %v794
      %v827 = vpack.c.bf16 %v795, %v795
      %v828 = vpack.c.bf16 %v796, %v796
      %v829 = vpack.c.bf16 %v797, %v797
      %vm830 = vcmask 519168
      %831 = vst.msk [vmem:[#allocation3] sm:$0xf] %vm830, %v798
      %832 = vst.msk [vmem:[#allocation3 + $0x4] sm:$0xf] %vm830, %v799
      %833 = vst.msk [vmem:[#allocation3 + $0x8] sm:$0xf] %vm830, %v800
      %834 = vst.msk [vmem:[#allocation3 + $0xc] sm:$0xf] %vm830, %v801
      %835 = vst.msk [vmem:[#allocation3 + $0x10] sm:$0xf] %vm830, %v802
      %836 = vst.msk [vmem:[#allocation3 + $0x14] sm:$0xf] %vm830, %v803
      %837 = vst.msk [vmem:[#allocation3 + $0x18] sm:$0xf] %vm830, %v804
      %838 = vst.msk [vmem:[#allocation3 + $0x1c] sm:$0xf] %vm830, %v805
      %839 = vst.msk [vmem:[#allocation3 + $0x20] sm:$0xf] %vm830, %v806
      %840 = vst.msk [vmem:[#allocation3 + $0x24] sm:$0xf] %vm830, %v807
      %841 = vst.msk [vmem:[#allocation3 + $0x28] sm:$0xf] %vm830, %v808
      %842 = vst.msk [vmem:[#allocation3 + $0x2c] sm:$0xf] %vm830, %v809
      %843 = vst.msk [vmem:[#allocation3 + $0x30] sm:$0xf] %vm830, %v810
      %844 = vst.msk [vmem:[#allocation3 + $0x34] sm:$0xf] %vm830, %v811
      %845 = vst.msk [vmem:[#allocation3 + $0x38] sm:$0xf] %vm830, %v812
      %846 = vst.msk [vmem:[#allocation3 + $0x3c] sm:$0xf] %vm830, %v813
      %847 = vst.msk [vmem:[#allocation3 + $0x40] sm:$0xf] %vm830, %v814
      %848 = vst.msk [vmem:[#allocation3 + $0x44] sm:$0xf] %vm830, %v815
      %849 = vst.msk [vmem:[#allocation3 + $0x48] sm:$0xf] %vm830, %v816
      %850 = vst.msk [vmem:[#allocation3 + $0x4c] sm:$0xf] %vm830, %v817
      %851 = vst.msk [vmem:[#allocation3 + $0x50] sm:$0xf] %vm830, %v818
      %852 = vst.msk [vmem:[#allocation3 + $0x54] sm:$0xf] %vm830, %v819
      %853 = vst.msk [vmem:[#allocation3 + $0x58] sm:$0xf] %vm830, %v820
      %854 = vst.msk [vmem:[#allocation3 + $0x5c] sm:$0xf] %vm830, %v821
      %855 = vst.msk [vmem:[#allocation3 + $0x60] sm:$0xf] %vm830, %v822
      %856 = vst.msk [vmem:[#allocation3 + $0x64] sm:$0xf] %vm830, %v823
      %857 = vst.msk [vmem:[#allocation3 + $0x68] sm:$0xf] %vm830, %v824
      %858 = vst.msk [vmem:[#allocation3 + $0x6c] sm:$0xf] %vm830, %v825
      %859 = vst.msk [vmem:[#allocation3 + $0x70] sm:$0xf] %vm830, %v826
      %860 = vst.msk [vmem:[#allocation3 + $0x74] sm:$0xf] %vm830, %v827
      %861 = vst.msk [vmem:[#allocation3 + $0x78] sm:$0xf] %vm830, %v828
      %862 = vst.msk [vmem:[#allocation3 + $0x7c] sm:$0xf] %vm830, %v829
    $region25: #{tpu_custom_call.1} parent=1 // pred_fallthru
      _
    // Predicated region
    $region26: #{tpu_custom_call.1} parent=1 // pred_check
      _
    $region27: #{tpu_custom_call.1} parent=1 // pred_check_branch
      %864 = sbr.rel (0) target = $region29
    $region28: #{tpu_custom_call.1} parent=1 // pred_region
      // Predicated region
      $region30: #{tpu_custom_call.1} parent=28 // pred_check
        _
      $region31: #{tpu_custom_call.1} parent=28 // pred_check_branch
        %866 = sbr.rel (0) target = $region33
      $region32: #{tpu_custom_call.1} parent=28 // pred_region
        // Predicated region
        $region34: #{tpu_custom_call.1} parent=32 // pred_check
          _
        $region35: #{tpu_custom_call.1} parent=32 // pred_check_branch
          %868 = sbr.rel target = $region37
        $region36: #{tpu_custom_call.1} parent=32 // pred_region
          // Predicated region
          $region49: #{tpu_custom_call.1} parent=36 // pred_check
            _
          $region50: #{tpu_custom_call.1} parent=36 // pred_check_branch
            %914 = sbr.rel (0) target = $region52
          $region51: #{tpu_custom_call.1} parent=36 // pred_region
            loop: start=0, step=1, limit=1
            $region53: #{tpu_custom_call.1} parent=51 // loop_pre_header
              _
            $region54: #{tpu_custom_call.1} parent=51 // loop_header
              %s916 = sphi 0, %s920
              %p917 = scmp.ge.s32.totalorder %s916, 1
              %s921 = sphi [#allocation3], [#allocation3]
              %s922 = sphi %s4, %s4
            $region55: #{tpu_custom_call.1} parent=51 // loop_header_branch
              %919 = sbr.rel (%p917) target = $region59
            $region56: #{tpu_custom_call.1} parent=51 // loop_body
              _
            $region57: #{tpu_custom_call.1} parent=51 // loop_footer
              %s920 = sadd.s32 1, %s916
            $region58: #{tpu_custom_call.1} parent=51 // loop_footer_branch
              %915 = sbr.rel target = $region54
            $region59: #{tpu_custom_call.1} parent=51 // loop_exit
              _
            %s924 = ssub.s32 16, 1
            loop: start=0, step=1, limit=1
            $region60: #{tpu_custom_call.1} parent=51 // loop_pre_header
              _
            $region61: #{tpu_custom_call.1} parent=51 // loop_header
              %s926 = sphi 0, %s930
              %p927 = scmp.ge.s32.totalorder %s926, 1
              %s931 = sphi [#allocation3], [#allocation3]
              %s932 = sphi %s4, %s4
            $region62: #{tpu_custom_call.1} parent=51 // loop_header_branch
              %929 = sbr.rel (%p927) target = $region66
            $region63: #{tpu_custom_call.1} parent=51 // loop_body
              %v933 = vld [vmem:[%s931] sm:%s924]
              %934 = vst [vmem:[%s932] sm:%s924] %v933
              %v935 = vld [vmem:[%s931 + $0x4] sm:%s924]
              %936 = vst [vmem:[%s932 + $0x4] sm:%s924] %v935
              %v937 = vld [vmem:[%s931 + $0x8] sm:%s924]
              %938 = vst [vmem:[%s932 + $0x8] sm:%s924] %v937
              %v939 = vld [vmem:[%s931 + $0xc] sm:%s924]
              %940 = vst [vmem:[%s932 + $0xc] sm:%s924] %v939
              %v941 = vld [vmem:[%s931 + $0x10] sm:%s924]
              %942 = vst [vmem:[%s932 + $0x10] sm:%s924] %v941
              %v943 = vld [vmem:[%s931 + $0x14] sm:%s924]
              %944 = vst [vmem:[%s932 + $0x14] sm:%s924] %v943
              %v945 = vld [vmem:[%s931 + $0x18] sm:%s924]
              %946 = vst [vmem:[%s932 + $0x18] sm:%s924] %v945
              %v947 = vld [vmem:[%s931 + $0x1c] sm:%s924]
              %948 = vst [vmem:[%s932 + $0x1c] sm:%s924] %v947
              %v949 = vld [vmem:[%s931 + $0x20] sm:%s924]
              %950 = vst [vmem:[%s932 + $0x20] sm:%s924] %v949
              %v951 = vld [vmem:[%s931 + $0x24] sm:%s924]
              %952 = vst [vmem:[%s932 + $0x24] sm:%s924] %v951
              %v953 = vld [vmem:[%s931 + $0x28] sm:%s924]
              %954 = vst [vmem:[%s932 + $0x28] sm:%s924] %v953
              %v955 = vld [vmem:[%s931 + $0x2c] sm:%s924]
              %956 = vst [vmem:[%s932 + $0x2c] sm:%s924] %v955
              %v957 = vld [vmem:[%s931 + $0x30] sm:%s924]
              %958 = vst [vmem:[%s932 + $0x30] sm:%s924] %v957
              %v959 = vld [vmem:[%s931 + $0x34] sm:%s924]
              %960 = vst [vmem:[%s932 + $0x34] sm:%s924] %v959
              %v961 = vld [vmem:[%s931 + $0x38] sm:%s924]
              %962 = vst [vmem:[%s932 + $0x38] sm:%s924] %v961
              %v963 = vld [vmem:[%s931 + $0x3c] sm:%s924]
              %964 = vst [vmem:[%s932 + $0x3c] sm:%s924] %v963
            $region64: #{tpu_custom_call.1} parent=51 // loop_footer
              %s930 = sadd.s32 1, %s926
            $region65: #{tpu_custom_call.1} parent=51 // loop_footer_branch
              %925 = sbr.rel target = $region61
            $region66: #{tpu_custom_call.1} parent=51 // loop_exit
              _
          $region52: #{tpu_custom_call.1} parent=36 // pred_fallthru
            _
        $region37: #{tpu_custom_call.1} parent=32 // pred_fallthru
          _
        // Predicated region
        $region38: #{tpu_custom_call.1} parent=32 // pred_check
          _
        $region39: #{tpu_custom_call.1} parent=32 // pred_check_branch
          %870 = sbr.rel (0) target = $region41
        $region40: #{tpu_custom_call.1} parent=32 // pred_region
          %s872 = ssub.s32 16, 1
          loop: start=0, step=1, limit=1
          $region42: #{tpu_custom_call.1} parent=40 // loop_pre_header
            _
          $region43: #{tpu_custom_call.1} parent=40 // loop_header
            %s874 = sphi 0, %s878
            %p875 = scmp.ge.s32.totalorder %s874, 1
            %s879 = sphi [#allocation3], [#allocation3]
            %s880 = sphi %s4, %s4
          $region44: #{tpu_custom_call.1} parent=40 // loop_header_branch
            %877 = sbr.rel (%p875) target = $region48
          $region45: #{tpu_custom_call.1} parent=40 // loop_body
            %v881 = vld [vmem:[%s879] sm:%s872]
            %882 = vst [vmem:[%s880] sm:%s872] %v881
            %v883 = vld [vmem:[%s879 + $0x4] sm:%s872]
            %884 = vst [vmem:[%s880 + $0x4] sm:%s872] %v883
            %v885 = vld [vmem:[%s879 + $0x8] sm:%s872]
            %886 = vst [vmem:[%s880 + $0x8] sm:%s872] %v885
            %v887 = vld [vmem:[%s879 + $0xc] sm:%s872]
            %888 = vst [vmem:[%s880 + $0xc] sm:%s872] %v887
            %v889 = vld [vmem:[%s879 + $0x10] sm:%s872]
            %890 = vst [vmem:[%s880 + $0x10] sm:%s872] %v889
            %v891 = vld [vmem:[%s879 + $0x14] sm:%s872]
            %892 = vst [vmem:[%s880 + $0x14] sm:%s872] %v891
            %v893 = vld [vmem:[%s879 + $0x18] sm:%s872]
            %894 = vst [vmem:[%s880 + $0x18] sm:%s872] %v893
            %v895 = vld [vmem:[%s879 + $0x1c] sm:%s872]
            %896 = vst [vmem:[%s880 + $0x1c] sm:%s872] %v895
            %v897 = vld [vmem:[%s879 + $0x20] sm:%s872]
            %898 = vst [vmem:[%s880 + $0x20] sm:%s872] %v897
            %v899 = vld [vmem:[%s879 + $0x24] sm:%s872]
            %900 = vst [vmem:[%s880 + $0x24] sm:%s872] %v899
            %v901 = vld [vmem:[%s879 + $0x28] sm:%s872]
            %902 = vst [vmem:[%s880 + $0x28] sm:%s872] %v901
            %v903 = vld [vmem:[%s879 + $0x2c] sm:%s872]
            %904 = vst [vmem:[%s880 + $0x2c] sm:%s872] %v903
            %v905 = vld [vmem:[%s879 + $0x30] sm:%s872]
            %906 = vst [vmem:[%s880 + $0x30] sm:%s872] %v905
            %v907 = vld [vmem:[%s879 + $0x34] sm:%s872]
            %908 = vst [vmem:[%s880 + $0x34] sm:%s872] %v907
            %v909 = vld [vmem:[%s879 + $0x38] sm:%s872]
            %910 = vst [vmem:[%s880 + $0x38] sm:%s872] %v909
            %v911 = vld [vmem:[%s879 + $0x3c] sm:%s872]
            %912 = vst [vmem:[%s880 + $0x3c] sm:%s872] %v911
          $region46: #{tpu_custom_call.1} parent=40 // loop_footer
            %s878 = sadd.s32 1, %s874
          $region47: #{tpu_custom_call.1} parent=40 // loop_footer_branch
            %873 = sbr.rel target = $region43
          $region48: #{tpu_custom_call.1} parent=40 // loop_exit
            _
        $region41: #{tpu_custom_call.1} parent=32 // pred_fallthru
          _
      $region33: #{tpu_custom_call.1} parent=28 // pred_fallthru
        _
      %965 = vnop
    $region29: #{tpu_custom_call.1} parent=1 // pred_fallthru
      _
    // Predicated region
    $region67: #{tpu_custom_call.1} parent=1 // pred_check
      _
    $region68: #{tpu_custom_call.1} parent=1 // pred_check_branch
      %967 = sbr.rel (0) target = $region70
    $region69: #{tpu_custom_call.1} parent=1 // pred_region
      _
    $region70: #{tpu_custom_call.1} parent=1 // pred_fallthru
      _

</llo_original>
